<compile_context>
chip_gen: v7x
topology: tpu7x:2x2x1
jax: 0.10.0
libtpu: 0.0.40
codegen_flags: <defaults>
</compile_context>

<pallas_src>
import functools

import jax
import jax.numpy as jnp
from jax import lax
from jax.experimental import pallas as pl
from jax.experimental.pallas import tpu as pltpu

# ogb.utils.features.get_bond_feature_dims() == [5, 6, 2]
FULL_BOND_FEATURE_DIMS = (5, 6, 2)

_strides = [1]
for _d in FULL_BOND_FEATURE_DIMS[:-1]:
    _strides.append(_strides[-1] * _d)
BOND_STRIDES = tuple(_strides)                     # (1, 5, 30)

NUM_COMBOS = 1
for _d in FULL_BOND_FEATURE_DIMS:
    NUM_COMBOS *= _d                               # 60 distinct bond-feature combos

VP = 128                                           # lane-aligned padded combined vocab
assert NUM_COMBOS <= VP, "combined vocab must fit in one 128-lane block"


def _choose_layout(emb_dim):
    """Returns (group, dp): pack `group` edges per 128-lane output row, dp = padded D."""
    if emb_dim < 128 and 128 % emb_dim == 0:
        return 128 // emb_dim, emb_dim
    # Fallback: one edge per row, D zero-padded up to a lane-dense multiple of 128.
    return 1, ((emb_dim + 127) // 128) * 128


def _round_up(x, m):
    return ((x + m - 1) // m) * m


def _bond_encoder_kernel(idx_ref, table_ref, out_ref, mh_ref, *, group, chunk, n_chunks):
    """One grid step = `tg` grouped rows (`group` edges per row).

    idx_ref:   (tg, group)            int32  combined bond index per edge
    table_ref: (group*VP, group*dp)   f32    block-diagonal combined table (resident)
    out_ref:   (tg, group*dp)         f32    lane-dense output rows
    mh_ref:    (chunk, group*VP)      f32    scratch: one-hot MXU operand
    """

    def do_chunk(row0):
        idx = idx_ref[pl.ds(row0, chunk), :]                          # (chunk, group)
        iota = lax.broadcasted_iota(jnp.int32, (chunk, VP), 1)
        for r in range(group):                                        # static unroll (<= 4 typ.)
            one_hot = (idx[:, r:r + 1] == iota).astype(jnp.float32)   # 1 cmp + 1 cast
            mh_ref[:, r * VP:(r + 1) * VP] = one_hot                  # 128-lane aligned store
        out_ref[pl.ds(row0, chunk), :] = jnp.dot(
            mh_ref[...], table_ref[...], preferred_element_type=jnp.float32)

    if n_chunks == 1:
        do_chunk(0)
    else:
        @pl.loop(0, n_chunks)
        def _(c):
            do_chunk(pl.multiple_of(c * chunk, chunk))


def make_bond_encoder_params(emb_dim, key):
    """Returns (table_kernel, feature_tables).

    feature_tables: 3 Xavier-uniform (dim, emb_dim) f32 tables (reference semantics).
    table_kernel:   (group*VP, group*dp) f32 block-diagonal combined table; row
                    a0 + 5*a1 + 30*a2 of each diagonal block = (T0[a0]+T1[a1])+T2[a2]
                    (same f32 add order as the PyTorch forward -> exact).
    """
    tables = []
    for i, dim in enumerate(FULL_BOND_FEATURE_DIMS):
        k = jax.random.fold_in(key, i)
        bound = (6.0 / (dim + emb_dim)) ** 0.5      # torch.nn.init.xavier_uniform_
        tables.append(jax.random.uniform(k, (dim, emb_dim), jnp.float32, -bound, bound))

    comb = tables[0][None, None, :, :] + tables[1][None, :, None, :]   # (1,6,5,D)
    comb = comb + tables[2][:, None, None, :]                          # (2,6,5,D)
    comb = comb.reshape(NUM_COMBOS, emb_dim)         # row index = a0 + 5*a1 + 30*a2

    group, dp = _choose_layout(emb_dim)
    base = jnp.zeros((VP, dp), jnp.float32).at[:NUM_COMBOS, :emb_dim].set(comb)
    if group == 1:
        table_kernel = base
    else:
        table_kernel = jnp.zeros((group * VP, group * dp), jnp.float32)
        for r in range(group):
            table_kernel = table_kernel.at[r * VP:(r + 1) * VP,
                                           r * dp:(r + 1) * dp].set(base)
    return table_kernel, tables


def bond_encoder(edge_attr, table_kernel, emb_dim, *, tile_edges=32768, chunk_rows=512):
    """edge_attr: (E, 3) int -> (E, emb_dim) f32.

    tile_edges: edges per grid step.  HBM traffic is ~(4 + 4*emb_dim) B/edge, so
      ~32K edges/step amortizes the ~0.35 us/step pipeline overhead on every TPU
      generation (use ~8-16K on v5e, 16-32K on v6e, 32K+ on v7x).
    chunk_rows: grouped rows per in-kernel compute chunk (bounds compiler VMEM
      temporaries independently of the DMA tile size).
    """
    num_edges, num_features = edge_attr.shape
    assert num_features == len(FULL_BOND_FEATURE_DIMS)
    group, dp = _choose_layout(emb_dim)
    assert table_kernel.shape == (group * VP, group * dp)

    # Combined bond-type index (0 .. NUM_COMBOS-1).
    ea = edge_attr.astype(jnp.int32)
    ci = ea[:, 0] * BOND_STRIDES[0]
    for f in range(1, num_features):
        ci = ci + ea[:, f] * BOND_STRIDES[f]

    # Pack `group` consecutive edges per grouped row (lane-dense 128-wide output).
    e_pad = _round_up(num_edges, group)
    if e_pad != num_edges:
        ci = jnp.pad(ci, (0, e_pad - num_edges))     # pad rows select row 0; sliced off below
    g_rows = e_pad // group
    idx = ci.reshape(g_rows, group)

    # Grid tile (tg grouped rows) and in-kernel chunk size.
    chunk = max(8, (chunk_rows // 8) * 8)
    if g_rows <= chunk:
        tg = g_rows                                  # single full-extent block
        chunk = g_rows
        n_chunks = 1
    else:
        want = max(chunk, (tile_edges // group) // chunk * chunk)
        # Keep >= 2 grid steps so the "parallel" axis can split across v7x's 2 TCs.
        half = _round_up(pl.cdiv(g_rows, 2), chunk)
        tg = min(want, half)
        n_chunks = tg // chunk
    grid = (pl.cdiv(g_rows, tg),)

    # VMEM budget: double-buffered idx/out/table blocks + scratch + compare temps.
    # Always pass an explicit limit >= the 32 MiB default (so big tiles also work on
    # v5e's 16 MiB scoped default), capped under v7x's 64 MiB physical VMEM.
    vmem_needed = (2 * (tg * 128 * 4                 # lane-padded int32 index block
                        + tg * group * dp * 4        # output block
                        + group * VP * group * dp * 4)   # resident table
                   + chunk * group * VP * 4          # one-hot scratch
                   + 3 * chunk * VP * 4)             # per-chunk compare temporaries
    vmem_limit = int(min(max(int(vmem_needed * 1.4), 32 * 1024 * 1024),
                         48 * 1024 * 1024))

    cost = pl.CostEstimate(
        flops=2 * g_rows * (group * VP) * (group * dp),
        transcendentals=0,
        bytes_accessed=idx.size * 4 + g_rows * group * dp * 4 + table_kernel.size * 4,
    )

    out = pl.pallas_call(
        functools.partial(_bond_encoder_kernel,
                          group=group, chunk=chunk, n_chunks=n_chunks),
        out_shape=jax.ShapeDtypeStruct((g_rows, group * dp), jnp.float32),
        grid_spec=pltpu.PrefetchScalarGridSpec(
            num_scalar_prefetch=0,
            grid=grid,
            in_specs=[
                pl.BlockSpec((tg, group), lambda i: (i, 0)),
                # Constant block index -> the table stays VMEM-resident across steps.
                pl.BlockSpec((group * VP, group * dp), lambda i: (0, 0)),
            ],
            out_specs=pl.BlockSpec((tg, group * dp), lambda i: (i, 0)),
            scratch_shapes=[pltpu.VMEM((chunk, group * VP), jnp.float32)],
        ),
        compiler_params=pltpu.CompilerParams(
            dimension_semantics=("parallel",), vmem_limit_bytes=vmem_limit),
        cost_estimate=cost,
    )(idx, table_kernel)

    # (g_rows, group*dp) row-major == (e_pad, dp); drop group/tile padding.
    # KEEP this slice: ragged-tail / pad rows contain garbage by design.
    return out.reshape(g_rows * group, dp)[:num_edges, :emb_dim]


def _reference(edge_attr, feature_tables):
    # Mirrors the PyTorch forward: running f32 sum over per-feature embeddings.
    out = 0
    for f, tbl in enumerate(feature_tables):
        out = out + tbl[edge_attr[:, f]]
    return out


if __name__ == "__main__":
    key = jax.random.PRNGKey(0)
    emb_dim = 32

    table_kernel, feature_tables = make_bond_encoder_params(
        emb_dim, jax.random.fold_in(key, 100))

    def random_edge_attr(n, salt):
        cols = []
        for i, dim in enumerate(FULL_BOND_FEATURE_DIMS):
            k = jax.random.fold_in(key, salt + i)
            cols.append(jax.random.randint(k, (n, 1), 0, dim, jnp.int32))
        return jnp.concatenate(cols, axis=1)

    # 1) Default (large-tile) config; 203 edges -> single full-extent block.
    edge_attr = random_edge_attr(203, 200)
    ref = _reference(edge_attr, feature_tables)
    out = jax.block_until_ready(bond_encoder(edge_attr, table_kernel, emb_dim))
    assert out.shape == (203, emb_dim)
    assert jnp.allclose(out, ref, atol=1e-5, rtol=1e-5)

    # 2) Small tiles: multi-step grid + multi-chunk in-kernel loop + ragged tails.
    edge_attr2 = random_edge_attr(777, 300)
    ref2 = _reference(edge_attr2, feature_tables)
    out2 = jax.block_until_ready(
        bond_encoder(edge_attr2, table_kernel, emb_dim, tile_edges=256, chunk_rows=32))
    assert out2.shape == (777, emb_dim)
    assert jnp.allclose(out2, ref2, atol=1e-5, rtol=1e-5)

    print("KERNEL_OK")
</pallas_src>

<mosaic_0001>
module attributes {stable_mosaic.version = 11 : i64} {
  func.func @_bond_encoder_kernel(%arg0: i32, %arg1: memref<51x4xi32, #tpu.memory_space<vmem>>, %arg2: memref<512x128xf32, #tpu.memory_space<vmem>>, %arg3: memref<51x128xf32, #tpu.memory_space<vmem>>, %arg4: memref<51x512xf32, #tpu.memory_space<vmem>>) attributes {dimension_semantics = [#tpu.dimension_semantics<parallel>], iteration_bounds = array<i64: 1>, scalar_prefetch = 0 : i64, scratch_operands = 1 : i64, tpu.core_type = #tpu.core_type<tc>, window_params = [{transform_indices = @transform_0, window_bounds = array<i64: 51, 4>}, {pipeline_mode = #tpu.pipeline_mode<synchronous>, transform_indices = @transform_1, window_bounds = array<i64: 512, 128>}, {transform_indices = @transform_2, window_bounds = array<i64: 51, 128>}]} {
    %c0 = arith.constant 0 : index
    %c0_0 = arith.constant 0 : index
    %0 = vector.load %arg1[%c0, %c0_0] : memref<51x4xi32, #tpu.memory_space<vmem>>, vector<51x4xi32>
    %1 = tpu.iota {dimensions = array<i32: 1>} : vector<51x128xi32>
    %2 = vector.extract_strided_slice %0 {offsets = [0, 0], sizes = [51, 1], strides = [1, 1]} : vector<51x4xi32> to vector<51x1xi32>
    %3 = vector.broadcast %2 : vector<51x1xi32> to vector<51x128xi32>
    %4 = arith.cmpi eq, %3, %1 : vector<51x128xi32>
    %5 = arith.extui %4 : vector<51x128xi1> to vector<51x128xi32>
    %6 = arith.sitofp %5 : vector<51x128xi32> to vector<51x128xf32>
    %c0_1 = arith.constant 0 : index
    %c0_2 = arith.constant 0 : index
    %7 = vector.load %arg4[%c0_1, %c0_2] : memref<51x512xf32, #tpu.memory_space<vmem>>, vector<51x128xf32>
    tpu.vector_store %arg4[%c0_1, %c0_2], %6 {strides = array<i32>} : memref<51x512xf32, #tpu.memory_space<vmem>>, vector<51x128xf32>,
    %8 = vector.extract_strided_slice %0 {offsets = [0, 1], sizes = [51, 1], strides = [1, 1]} : vector<51x4xi32> to vector<51x1xi32>
    %9 = vector.broadcast %8 : vector<51x1xi32> to vector<51x128xi32>
    %10 = arith.cmpi eq, %9, %1 : vector<51x128xi32>
    %11 = arith.extui %10 : vector<51x128xi1> to vector<51x128xi32>
    %12 = arith.sitofp %11 : vector<51x128xi32> to vector<51x128xf32>
    %c0_3 = arith.constant 0 : index
    %c128 = arith.constant 128 : index
    %13 = vector.load %arg4[%c0_3, %c128] : memref<51x512xf32, #tpu.memory_space<vmem>>, vector<51x128xf32>
    tpu.vector_store %arg4[%c0_3, %c128], %12 {strides = array<i32>} : memref<51x512xf32, #tpu.memory_space<vmem>>, vector<51x128xf32>,
    %14 = vector.extract_strided_slice %0 {offsets = [0, 2], sizes = [51, 1], strides = [1, 1]} : vector<51x4xi32> to vector<51x1xi32>
    %15 = vector.broadcast %14 : vector<51x1xi32> to vector<51x128xi32>
    %16 = arith.cmpi eq, %15, %1 : vector<51x128xi32>
    %17 = arith.extui %16 : vector<51x128xi1> to vector<51x128xi32>
    %18 = arith.sitofp %17 : vector<51x128xi32> to vector<51x128xf32>
    %c0_4 = arith.constant 0 : index
    %c256 = arith.constant 256 : index
    %19 = vector.load %arg4[%c0_4, %c256] : memref<51x512xf32, #tpu.memory_space<vmem>>, vector<51x128xf32>
    tpu.vector_store %arg4[%c0_4, %c256], %18 {strides = array<i32>} : memref<51x512xf32, #tpu.memory_space<vmem>>, vector<51x128xf32>,
    %20 = vector.extract_strided_slice %0 {offsets = [0, 3], sizes = [51, 1], strides = [1, 1]} : vector<51x4xi32> to vector<51x1xi32>
    %21 = vector.broadcast %20 : vector<51x1xi32> to vector<51x128xi32>
    %22 = arith.cmpi eq, %21, %1 : vector<51x128xi32>
    %23 = arith.extui %22 : vector<51x128xi1> to vector<51x128xi32>
    %24 = arith.sitofp %23 : vector<51x128xi32> to vector<51x128xf32>
    %c0_5 = arith.constant 0 : index
    %c384 = arith.constant 384 : index
    %25 = vector.load %arg4[%c0_5, %c384] : memref<51x512xf32, #tpu.memory_space<vmem>>, vector<51x128xf32>
    tpu.vector_store %arg4[%c0_5, %c384], %24 {strides = array<i32>} : memref<51x512xf32, #tpu.memory_space<vmem>>, vector<51x128xf32>,
    %c0_6 = arith.constant 0 : index
    %c0_7 = arith.constant 0 : index
    %26 = vector.load %arg4[%c0_6, %c0_7] : memref<51x512xf32, #tpu.memory_space<vmem>>, vector<51x512xf32>
    %c0_8 = arith.constant 0 : index
    %c0_9 = arith.constant 0 : index
    %27 = vector.load %arg2[%c0_8, %c0_9] : memref<512x128xf32, #tpu.memory_space<vmem>>, vector<512x128xf32>
    %cst = arith.constant dense<0.000000e+00> : vector<51x128xf32>
    %28 = tpu.matmul %26, %27, %cst {dimension_numbers = #tpu.dot_dimension_numbers<[1], [0], [0], [1], [0, 0, 1, 1], [], []>} : vector<51x512xf32>, vector<512x128xf32>, vector<51x128xf32> -> vector<51x128xf32>
    %c0_10 = arith.constant 0 : index
    %c0_11 = arith.constant 0 : index
    %29 = vector.load %arg3[%c0_10, %c0_11] : memref<51x128xf32, #tpu.memory_space<vmem>>, vector<51x128xf32>
    tpu.vector_store %arg3[%c0_10, %c0_11], %28 {strides = array<i32>} : memref<51x128xf32, #tpu.memory_space<vmem>>, vector<51x128xf32>,
    return
  }
  func.func @transform_0(%arg0: i32) -> (i32, i32) {
    %c0_i32 = arith.constant 0 : i32
    %c0_i32_0 = arith.constant 0 : i32
    return %arg0, %c0_i32 : i32, i32
  }
  func.func @transform_1(%arg0: i32) -> (i32, i32) {
    %c0_i32 = arith.constant 0 : i32
    %c0_i32_0 = arith.constant 0 : i32
    %c0_i32_1 = arith.constant 0 : i32
    return %c0_i32, %c0_i32_0 : i32, i32
  }
  func.func @transform_2(%arg0: i32) -> (i32, i32) {
    %c0_i32 = arith.constant 0 : i32
    %c0_i32_0 = arith.constant 0 : i32
    return %arg0, %c0_i32 : i32, i32
  }
}

</mosaic_0001>

<llo_original>
// kernel: tpu_custom_call.1
$region0: #{tpu_custom_call.1}
  #allocation0 [shape = 'u32[]', space=smem, size = 0x4, offset = 0x4, fixed_abs, tag = 'smem constant byte address 0x4 - core index']
  #allocation1 [shape = 'u32[144,128]{1,0:T(1,128)}', space=vmem, size = 0x12000, scoped, tag = 'internal scratch']
  #allocation2 [shape = 'f32[51,512]{1,0:T(8,128)}', space=vmem, size = 0x1c000, scoped, tag = 'scratch operand']
  %s0 = inlined_call_operand.vmem [shape: s32[51,4], index: 0, kind: input, shape index: {}]
  %s1 = inlined_call_operand.hbm [shape: f32[512,128], index: 1, kind: input, shape index: {}]
  %s2 = inlined_call_operand.hbm [shape: f32[51,128], index: 2, kind: output, shape index: {}]
  %s3 = sld [smem:[#allocation0]]
  $region22: #{tpu_custom_call.1} parent=0
    _
  %s5 = ssub.s32 1, %s3
  %s6 = scalar_select 0, %s5, %s3
  $region1: #{tpu_custom_call.1} parent=0
    #allocation3 [shape = 'u8[262144]{0}', space=vmem, size = 0x40000, scoped, tag = 'input window, operand 1, single buffered']
    #allocation4 [shape = 's32[1]{0}', space=sflag, size = 0x4, scoped, tag = 'scoped memory for tpu_custom_call.1']
    #allocation5 [shape = 's32[1]{0}', space=sflag, size = 0x4, scoped, tag = 'scoped memory for tpu_custom_call.1']
    #allocation6 [shape = 'u8[28672]{0}', space=vmem, size = 0x7000, scoped, tag = 'output window, operand 0, single buffered']
    %7 = vsyncpa [#allocation4], 0
    %8 = vsyncpa [#allocation5], 0
    // Predicated region
    $region2: #{tpu_custom_call.1} parent=1 // pred_check
      _
    $region3: #{tpu_custom_call.1} parent=1 // pred_check_branch
      %10 = sbr.rel (0) target = $region5
    $region4: #{tpu_custom_call.1} parent=1 // pred_region
      _
    $region5: #{tpu_custom_call.1} parent=1 // pred_fallthru
      _
    // Predicated region
    $region6: #{tpu_custom_call.1} parent=1 // pred_check
      _
    $region7: #{tpu_custom_call.1} parent=1 // pred_check_branch
      %12 = sbr.rel (0) target = $region9
    $region8: #{tpu_custom_call.1} parent=1 // pred_region
      %s14 = ssub.s32 8192, 8192
      %15 = vsyncadd [#allocation4], %s14
      %s16 = sshll.u32 [#allocation3], 4
      %s17 = int_to_ptr.vmem [resolvable:$true] %s16
      %22 = dma.hbm_to_vmem [thread:$0]  %s1, 8192, %s17, [#allocation4], 128, 128, 8
    $region9: #{tpu_custom_call.1} parent=1 // pred_fallthru
      _
    // Predicated region
    $region10: #{tpu_custom_call.1} parent=1 // pred_check
      _
    $region11: #{tpu_custom_call.1} parent=1 // pred_check_branch
      %24 = sbr.rel (0) target = $region13
    $region12: #{tpu_custom_call.1} parent=1 // pred_region
      %25 = dma.done [#allocation4], 8192
    $region13: #{tpu_custom_call.1} parent=1 // pred_fallthru
      _
    %v26 = vld [vmem:[%s0] sm:$0xff]
    %v27 = vld [vmem:[%s0 + $0x8] sm:$0xff]
    %v28 = vld [vmem:[%s0 + $0x10] sm:$0xff]
    %v29 = vld [vmem:[%s0 + $0x18] sm:$0xff]
    %v30 = vld [vmem:[%s0 + $0x20] sm:$0xff]
    %v31 = vld [vmem:[%s0 + $0x28] sm:$0xff]
    %v32 = vld [vmem:[%s0 + $0x30] sm:$0x7]
    %v33 = vlaneseq
    %v34 = vand.u32 %v33, 127
    %35 = vset.pattern.permute.xlu0 0
    %36 = vperm.xlu0 %35, %v26
    %v37 = vpop.permute.xlu0 %36
    %38 = vset.pattern.permute.xlu0 0
    %39 = vperm.xlu0 %38, %v27
    %v40 = vpop.permute.xlu0 %39
    %41 = vset.pattern.permute.xlu0 0
    %42 = vperm.xlu0 %41, %v28
    %v43 = vpop.permute.xlu0 %42
    %44 = vset.pattern.permute.xlu0 0
    %45 = vperm.xlu0 %44, %v29
    %v46 = vpop.permute.xlu0 %45
    %47 = vset.pattern.permute.xlu0 0
    %48 = vperm.xlu0 %47, %v30
    %v49 = vpop.permute.xlu0 %48
    %50 = vset.pattern.permute.xlu0 0
    %51 = vperm.xlu0 %50, %v31
    %v52 = vpop.permute.xlu0 %51
    %53 = vset.pattern.permute.xlu0 0
    %54 = vperm.xlu0 %53, %v32
    %v55 = vpop.permute.xlu0 %54
    %vm56 = vcmp.eq.s32.totalorder %v37, %v34
    %vm57 = vcmp.eq.s32.totalorder %v40, %v34
    %vm58 = vcmp.eq.s32.totalorder %v43, %v34
    %vm59 = vcmp.eq.s32.totalorder %v46, %v34
    %vm60 = vcmp.eq.s32.totalorder %v49, %v34
    %vm61 = vcmp.eq.s32.totalorder %v52, %v34
    %vm62 = vcmp.eq.s32.totalorder %v55, %v34
    %v63 = vsel %vm56, 1, 0
    %v64 = vsel %vm57, 1, 0
    %v65 = vsel %vm58, 1, 0
    %v66 = vsel %vm59, 1, 0
    %v67 = vsel %vm60, 1, 0
    %v68 = vsel %vm61, 1, 0
    %v69 = vsel %vm62, 1, 0
    %v70 = vcvt.s32.f32 %v63
    %v71 = vcvt.s32.f32 %v64
    %v72 = vcvt.s32.f32 %v65
    %v73 = vcvt.s32.f32 %v66
    %v74 = vcvt.s32.f32 %v67
    %v75 = vcvt.s32.f32 %v68
    %v76 = vcvt.s32.f32 %v69
    %77 = vst [vmem:[#allocation2] sm:$0xff] %v70
    %78 = vst [vmem:[#allocation2 + $0x20] sm:$0xff] %v71
    %79 = vst [vmem:[#allocation2 + $0x40] sm:$0xff] %v72
    %80 = vst [vmem:[#allocation2 + $0x60] sm:$0xff] %v73
    %81 = vst [vmem:[#allocation2 + $0x80] sm:$0xff] %v74
    %82 = vst [vmem:[#allocation2 + $0xa0] sm:$0xff] %v75
    %83 = vst [vmem:[#allocation2 + $0xc0] sm:$0x7] %v76
    %84 = vset.pattern.permute.xlu0 1
    %85 = vperm.xlu0 %84, %v26
    %v86 = vpop.permute.xlu0 %85
    %87 = vset.pattern.permute.xlu0 1
    %88 = vperm.xlu0 %87, %v27
    %v89 = vpop.permute.xlu0 %88
    %90 = vset.pattern.permute.xlu0 1
    %91 = vperm.xlu0 %90, %v28
    %v92 = vpop.permute.xlu0 %91
    %93 = vset.pattern.permute.xlu0 1
    %94 = vperm.xlu0 %93, %v29
    %v95 = vpop.permute.xlu0 %94
    %96 = vset.pattern.permute.xlu0 1
    %97 = vperm.xlu0 %96, %v30
    %v98 = vpop.permute.xlu0 %97
    %99 = vset.pattern.permute.xlu0 1
    %100 = vperm.xlu0 %99, %v31
    %v101 = vpop.permute.xlu0 %100
    %102 = vset.pattern.permute.xlu0 1
    %103 = vperm.xlu0 %102, %v32
    %v104 = vpop.permute.xlu0 %103
    %vm105 = vcmp.eq.s32.totalorder %v86, %v34
    %vm106 = vcmp.eq.s32.totalorder %v89, %v34
    %vm107 = vcmp.eq.s32.totalorder %v92, %v34
    %vm108 = vcmp.eq.s32.totalorder %v95, %v34
    %vm109 = vcmp.eq.s32.totalorder %v98, %v34
    %vm110 = vcmp.eq.s32.totalorder %v101, %v34
    %vm111 = vcmp.eq.s32.totalorder %v104, %v34
    %v112 = vsel %vm105, 1, 0
    %v113 = vsel %vm106, 1, 0
    %v114 = vsel %vm107, 1, 0
    %v115 = vsel %vm108, 1, 0
    %v116 = vsel %vm109, 1, 0
    %v117 = vsel %vm110, 1, 0
    %v118 = vsel %vm111, 1, 0
    %v119 = vcvt.s32.f32 %v112
    %v120 = vcvt.s32.f32 %v113
    %v121 = vcvt.s32.f32 %v114
    %v122 = vcvt.s32.f32 %v115
    %v123 = vcvt.s32.f32 %v116
    %v124 = vcvt.s32.f32 %v117
    %v125 = vcvt.s32.f32 %v118
    %126 = vst [vmem:[#allocation2 + $0x8] sm:$0xff] %v119
    %127 = vst [vmem:[#allocation2 + $0x28] sm:$0xff] %v120
    %128 = vst [vmem:[#allocation2 + $0x48] sm:$0xff] %v121
    %129 = vst [vmem:[#allocation2 + $0x68] sm:$0xff] %v122
    %130 = vst [vmem:[#allocation2 + $0x88] sm:$0xff] %v123
    %131 = vst [vmem:[#allocation2 + $0xa8] sm:$0xff] %v124
    %132 = vst [vmem:[#allocation2 + $0xc8] sm:$0x7] %v125
    %133 = vset.pattern.permute.xlu0 2
    %134 = vperm.xlu0 %133, %v26
    %v135 = vpop.permute.xlu0 %134
    %136 = vset.pattern.permute.xlu0 2
    %137 = vperm.xlu0 %136, %v27
    %v138 = vpop.permute.xlu0 %137
    %139 = vset.pattern.permute.xlu0 2
    %140 = vperm.xlu0 %139, %v28
    %v141 = vpop.permute.xlu0 %140
    %142 = vset.pattern.permute.xlu0 2
    %143 = vperm.xlu0 %142, %v29
    %v144 = vpop.permute.xlu0 %143
    %145 = vset.pattern.permute.xlu0 2
    %146 = vperm.xlu0 %145, %v30
    %v147 = vpop.permute.xlu0 %146
    %148 = vset.pattern.permute.xlu0 2
    %149 = vperm.xlu0 %148, %v31
    %v150 = vpop.permute.xlu0 %149
    %151 = vset.pattern.permute.xlu0 2
    %152 = vperm.xlu0 %151, %v32
    %v153 = vpop.permute.xlu0 %152
    %vm154 = vcmp.eq.s32.totalorder %v135, %v34
    %vm155 = vcmp.eq.s32.totalorder %v138, %v34
    %vm156 = vcmp.eq.s32.totalorder %v141, %v34
    %vm157 = vcmp.eq.s32.totalorder %v144, %v34
    %vm158 = vcmp.eq.s32.totalorder %v147, %v34
    %vm159 = vcmp.eq.s32.totalorder %v150, %v34
    %vm160 = vcmp.eq.s32.totalorder %v153, %v34
    %v161 = vsel %vm154, 1, 0
    %v162 = vsel %vm155, 1, 0
    %v163 = vsel %vm156, 1, 0
    %v164 = vsel %vm157, 1, 0
    %v165 = vsel %vm158, 1, 0
    %v166 = vsel %vm159, 1, 0
    %v167 = vsel %vm160, 1, 0
    %v168 = vcvt.s32.f32 %v161
    %v169 = vcvt.s32.f32 %v162
    %v170 = vcvt.s32.f32 %v163
    %v171 = vcvt.s32.f32 %v164
    %v172 = vcvt.s32.f32 %v165
    %v173 = vcvt.s32.f32 %v166
    %v174 = vcvt.s32.f32 %v167
    %175 = vst [vmem:[#allocation2 + $0x10] sm:$0xff] %v168
    %176 = vst [vmem:[#allocation2 + $0x30] sm:$0xff] %v169
    %177 = vst [vmem:[#allocation2 + $0x50] sm:$0xff] %v170
    %178 = vst [vmem:[#allocation2 + $0x70] sm:$0xff] %v171
    %179 = vst [vmem:[#allocation2 + $0x90] sm:$0xff] %v172
    %180 = vst [vmem:[#allocation2 + $0xb0] sm:$0xff] %v173
    %181 = vst [vmem:[#allocation2 + $0xd0] sm:$0x7] %v174
    %182 = vset.pattern.permute.xlu0 3
    %183 = vperm.xlu0 %182, %v26
    %v184 = vpop.permute.xlu0 %183
    %185 = vset.pattern.permute.xlu0 3
    %186 = vperm.xlu0 %185, %v27
    %v187 = vpop.permute.xlu0 %186
    %188 = vset.pattern.permute.xlu0 3
    %189 = vperm.xlu0 %188, %v28
    %v190 = vpop.permute.xlu0 %189
    %191 = vset.pattern.permute.xlu0 3
    %192 = vperm.xlu0 %191, %v29
    %v193 = vpop.permute.xlu0 %192
    %194 = vset.pattern.permute.xlu0 3
    %195 = vperm.xlu0 %194, %v30
    %v196 = vpop.permute.xlu0 %195
    %197 = vset.pattern.permute.xlu0 3
    %198 = vperm.xlu0 %197, %v31
    %v199 = vpop.permute.xlu0 %198
    %200 = vset.pattern.permute.xlu0 3
    %201 = vperm.xlu0 %200, %v32
    %v202 = vpop.permute.xlu0 %201
    %vm203 = vcmp.eq.s32.totalorder %v184, %v34
    %vm204 = vcmp.eq.s32.totalorder %v187, %v34
    %vm205 = vcmp.eq.s32.totalorder %v190, %v34
    %vm206 = vcmp.eq.s32.totalorder %v193, %v34
    %vm207 = vcmp.eq.s32.totalorder %v196, %v34
    %vm208 = vcmp.eq.s32.totalorder %v199, %v34
    %vm209 = vcmp.eq.s32.totalorder %v202, %v34
    %v210 = vsel %vm203, 1, 0
    %v211 = vsel %vm204, 1, 0
    %v212 = vsel %vm205, 1, 0
    %v213 = vsel %vm206, 1, 0
    %v214 = vsel %vm207, 1, 0
    %v215 = vsel %vm208, 1, 0
    %v216 = vsel %vm209, 1, 0
    %v217 = vcvt.s32.f32 %v210
    %v218 = vcvt.s32.f32 %v211
    %v219 = vcvt.s32.f32 %v212
    %v220 = vcvt.s32.f32 %v213
    %v221 = vcvt.s32.f32 %v214
    %v222 = vcvt.s32.f32 %v215
    %v223 = vcvt.s32.f32 %v216
    %224 = vst [vmem:[#allocation2 + $0x18] sm:$0xff] %v217
    %225 = vst [vmem:[#allocation2 + $0x38] sm:$0xff] %v218
    %226 = vst [vmem:[#allocation2 + $0x58] sm:$0xff] %v219
    %227 = vst [vmem:[#allocation2 + $0x78] sm:$0xff] %v220
    %228 = vst [vmem:[#allocation2 + $0x98] sm:$0xff] %v221
    %229 = vst [vmem:[#allocation2 + $0xb8] sm:$0xff] %v222
    %230 = vst [vmem:[#allocation2 + $0xd8] sm:$0x7] %v223
    %v231 = vld [vmem:[#allocation2] sm:$0xff]
    %v232 = vld [vmem:[#allocation2 + $0x8] sm:$0xff]
    %v233 = vld [vmem:[#allocation2 + $0x10] sm:$0xff]
    %v234 = vld [vmem:[#allocation2 + $0x18] sm:$0xff]
    %v235 = vld [vmem:[#allocation2 + $0x20] sm:$0xff]
    %v236 = vld [vmem:[#allocation2 + $0x28] sm:$0xff]
    %v237 = vld [vmem:[#allocation2 + $0x30] sm:$0xff]
    %v238 = vld [vmem:[#allocation2 + $0x38] sm:$0xff]
    %v239 = vld [vmem:[#allocation2 + $0x40] sm:$0xff]
    %v240 = vld [vmem:[#allocation2 + $0x48] sm:$0xff]
    %v241 = vld [vmem:[#allocation2 + $0x50] sm:$0xff]
    %v242 = vld [vmem:[#allocation2 + $0x58] sm:$0xff]
    %v243 = vld [vmem:[#allocation2 + $0x60] sm:$0xff]
    %v244 = vld [vmem:[#allocation2 + $0x68] sm:$0xff]
    %v245 = vld [vmem:[#allocation2 + $0x70] sm:$0xff]
    %v246 = vld [vmem:[#allocation2 + $0x78] sm:$0xff]
    %v247 = vld [vmem:[#allocation2 + $0x80] sm:$0xff]
    %v248 = vld [vmem:[#allocation2 + $0x88] sm:$0xff]
    %v249 = vld [vmem:[#allocation2 + $0x90] sm:$0xff]
    %v250 = vld [vmem:[#allocation2 + $0x98] sm:$0xff]
    %v251 = vld [vmem:[#allocation2 + $0xa0] sm:$0xff]
    %v252 = vld [vmem:[#allocation2 + $0xa8] sm:$0xff]
    %v253 = vld [vmem:[#allocation2 + $0xb0] sm:$0xff]
    %v254 = vld [vmem:[#allocation2 + $0xb8] sm:$0xff]
    %v255 = vld [vmem:[#allocation2 + $0xc0] sm:$0x7]
    %v256 = vld [vmem:[#allocation2 + $0xc8] sm:$0x7]
    %v257 = vld [vmem:[#allocation2 + $0xd0] sm:$0x7]
    %v258 = vld [vmem:[#allocation2 + $0xd8] sm:$0x7]
    %v259 = vld [vmem:[#allocation3] sm:$0xff]
    %v260 = vld [vmem:[#allocation3 + $0x8] sm:$0xff]
    %v261 = vld [vmem:[#allocation3 + $0x10] sm:$0xff]
    %v262 = vld [vmem:[#allocation3 + $0x18] sm:$0xff]
    %v263 = vld [vmem:[#allocation3 + $0x20] sm:$0xff]
    %v264 = vld [vmem:[#allocation3 + $0x28] sm:$0xff]
    %v265 = vld [vmem:[#allocation3 + $0x30] sm:$0xff]
    %v266 = vld [vmem:[#allocation3 + $0x38] sm:$0xff]
    %v267 = vld [vmem:[#allocation3 + $0x40] sm:$0xff]
    %v268 = vld [vmem:[#allocation3 + $0x48] sm:$0xff]
    %v269 = vld [vmem:[#allocation3 + $0x50] sm:$0xff]
    %v270 = vld [vmem:[#allocation3 + $0x58] sm:$0xff]
    %v271 = vld [vmem:[#allocation3 + $0x60] sm:$0xff]
    %v272 = vld [vmem:[#allocation3 + $0x68] sm:$0xff]
    %v273 = vld [vmem:[#allocation3 + $0x70] sm:$0xff]
    %v274 = vld [vmem:[#allocation3 + $0x78] sm:$0xff]
    %v275 = vld [vmem:[#allocation3 + $0x80] sm:$0xff]
    %v276 = vld [vmem:[#allocation3 + $0x88] sm:$0xff]
    %v277 = vld [vmem:[#allocation3 + $0x90] sm:$0xff]
    %v278 = vld [vmem:[#allocation3 + $0x98] sm:$0xff]
    %v279 = vld [vmem:[#allocation3 + $0xa0] sm:$0xff]
    %v280 = vld [vmem:[#allocation3 + $0xa8] sm:$0xff]
    %v281 = vld [vmem:[#allocation3 + $0xb0] sm:$0xff]
    %v282 = vld [vmem:[#allocation3 + $0xb8] sm:$0xff]
    %v283 = vld [vmem:[#allocation3 + $0xc0] sm:$0xff]
    %v284 = vld [vmem:[#allocation3 + $0xc8] sm:$0xff]
    %v285 = vld [vmem:[#allocation3 + $0xd0] sm:$0xff]
    %v286 = vld [vmem:[#allocation3 + $0xd8] sm:$0xff]
    %v287 = vld [vmem:[#allocation3 + $0xe0] sm:$0xff]
    %v288 = vld [vmem:[#allocation3 + $0xe8] sm:$0xff]
    %v289 = vld [vmem:[#allocation3 + $0xf0] sm:$0xff]
    %v290 = vld [vmem:[#allocation3 + $0xf8] sm:$0xff]
    %v291 = vld [vmem:[#allocation3 + $0x100] sm:$0xff]
    %v292 = vld [vmem:[#allocation3 + $0x108] sm:$0xff]
    %v293 = vld [vmem:[#allocation3 + $0x110] sm:$0xff]
    %v294 = vld [vmem:[#allocation3 + $0x118] sm:$0xff]
    %v295 = vld [vmem:[#allocation3 + $0x120] sm:$0xff]
    %v296 = vld [vmem:[#allocation3 + $0x128] sm:$0xff]
    %v297 = vld [vmem:[#allocation3 + $0x130] sm:$0xff]
    %v298 = vld [vmem:[#allocation3 + $0x138] sm:$0xff]
    %v299 = vld [vmem:[#allocation3 + $0x140] sm:$0xff]
    %v300 = vld [vmem:[#allocation3 + $0x148] sm:$0xff]
    %v301 = vld [vmem:[#allocation3 + $0x150] sm:$0xff]
    %v302 = vld [vmem:[#allocation3 + $0x158] sm:$0xff]
    %v303 = vld [vmem:[#allocation3 + $0x160] sm:$0xff]
    %v304 = vld [vmem:[#allocation3 + $0x168] sm:$0xff]
    %v305 = vld [vmem:[#allocation3 + $0x170] sm:$0xff]
    %v306 = vld [vmem:[#allocation3 + $0x178] sm:$0xff]
    %v307 = vld [vmem:[#allocation3 + $0x180] sm:$0xff]
    %v308 = vld [vmem:[#allocation3 + $0x188] sm:$0xff]
    %v309 = vld [vmem:[#allocation3 + $0x190] sm:$0xff]
    %v310 = vld [vmem:[#allocation3 + $0x198] sm:$0xff]
    %v311 = vld [vmem:[#allocation3 + $0x1a0] sm:$0xff]
    %v312 = vld [vmem:[#allocation3 + $0x1a8] sm:$0xff]
    %v313 = vld [vmem:[#allocation3 + $0x1b0] sm:$0xff]
    %v314 = vld [vmem:[#allocation3 + $0x1b8] sm:$0xff]
    %v315 = vld [vmem:[#allocation3 + $0x1c0] sm:$0xff]
    %v316 = vld [vmem:[#allocation3 + $0x1c8] sm:$0xff]
    %v317 = vld [vmem:[#allocation3 + $0x1d0] sm:$0xff]
    %v318 = vld [vmem:[#allocation3 + $0x1d8] sm:$0xff]
    %v319 = vld [vmem:[#allocation3 + $0x1e0] sm:$0xff]
    %v320 = vld [vmem:[#allocation3 + $0x1e8] sm:$0xff]
    %v321 = vld [vmem:[#allocation3 + $0x1f0] sm:$0xff]
    %v322 = vld [vmem:[#allocation3 + $0x1f8] sm:$0xff]
    %323 = vmatprep.subr.mxu0 0.0
    %324 = vmatpush1.msra.mxu0 %v259
    %325 = vmatprep.subr.mxu0 0.0
    %326 = vmatpush1.msra.mxu0 %v260
    %327 = vmatprep.subr.mxu0 0.0
    %328 = vmatpush1.msra.mxu0 %v261
    %329 = vmatprep.subr.mxu0 0.0
    %330 = vmatpush1.msra.mxu0 %v262
    %331 = vmatprep.subr.mxu0 0.0
    %332 = vmatpush1.msra.mxu0 %v263
    %333 = vmatprep.subr.mxu0 0.0
    %334 = vmatpush1.msra.mxu0 %v264
    %335 = vmatprep.subr.mxu0 0.0
    %336 = vmatpush1.msra.mxu0 %v265
    %337 = vmatprep.subr.mxu0 0.0
    %338 = vmatpush1.msra.mxu0 %v266
    %339 = vmatprep.subr.mxu0 0.0
    %340 = vmatpush1.msra.mxu0 %v267
    %341 = vmatprep.subr.mxu0 0.0
    %342 = vmatpush1.msra.mxu0 %v268
    %343 = vmatprep.subr.mxu0 0.0
    %344 = vmatpush1.msra.mxu0 %v269
    %345 = vmatprep.subr.mxu0 0.0
    %346 = vmatpush1.msra.mxu0 %v270
    %347 = vmatprep.subr.mxu0 0.0
    %348 = vmatpush1.msra.mxu0 %v271
    %349 = vmatprep.subr.mxu0 0.0
    %350 = vmatpush1.msra.mxu0 %v272
    %351 = vmatprep.subr.mxu0 0.0
    %352 = vmatpush1.msra.mxu0 %v273
    %353 = vmatprep.subr.mxu0 0.0
    %354 = vmatpush1.msra.mxu0 %v274
    %355 = vmatprep.subr.mxu0 0.0
    %356 = vmatpush1.msra.mxu0 %v275
    %357 = vmatprep.subr.mxu0 0.0
    %358 = vmatpush1.msra.mxu0 %v276
    %359 = vmatprep.subr.mxu0 0.0
    %360 = vmatpush1.msra.mxu0 %v277
    %361 = vmatprep.subr.mxu0 0.0
    %362 = vmatpush1.msra.mxu0 %v278
    %363 = vmatprep.subr.mxu0 0.0
    %364 = vmatpush1.msra.mxu0 %v279
    %365 = vmatprep.subr.mxu0 0.0
    %366 = vmatpush1.msra.mxu0 %v280
    %367 = vmatprep.subr.mxu0 0.0
    %368 = vmatpush1.msra.mxu0 %v281
    %369 = vmatprep.subr.mxu0 0.0
    %370 = vmatpush1.msra.mxu0 %v282
    %371 = vmatprep.subr.mxu0 0.0
    %372 = vmatpush1.msra.mxu0 %v283
    %373 = vmatprep.subr.mxu0 0.0
    %374 = vmatpush1.msra.mxu0 %v284
    %375 = vmatprep.subr.mxu0 0.0
    %376 = vmatpush1.msra.mxu0 %v285
    %377 = vmatprep.subr.mxu0 0.0
    %378 = vmatpush1.msra.mxu0 %v286
    %379 = vmatprep.subr.mxu0 0.0
    %380 = vmatpush1.msra.mxu0 %v287
    %381 = vmatprep.subr.mxu0 0.0
    %382 = vmatpush1.msra.mxu0 %v288
    %383 = vmatprep.subr.mxu0 0.0
    %384 = vmatpush1.msra.mxu0 %v289
    %385 = vmatprep.subr.mxu0 0.0
    %386 = vmatpush1.msra.mxu0 %v290
    %387 = vmatprep.mubr.f32.mxu0 %v232
    %388 = vmatmul.mubr.f32.gmra.mrb[0].mxu0 %v231
    %v389 = vpop.f32.mrb[0].mxu0
    %v390 = vadd.f32 0.0, %v389
    %v391 = vpop.f32.mrb[0].mxu0
    %392 = vmatprep.mubr.f32.mxu0 %v236
    %393 = vmatmul.mubr.f32.gmra.mrb[0].mxu0 %v235
    %v394 = vpop.f32.mrb[0].mxu0
    %v395 = vadd.f32 0.0, %v394
    %v396 = vpop.f32.mrb[0].mxu0
    %397 = vmatprep.mubr.f32.mxu0 %v240
    %398 = vmatmul.mubr.f32.gmra.mrb[0].mxu0 %v239
    %v399 = vpop.f32.mrb[0].mxu0
    %v400 = vadd.f32 0.0, %v399
    %v401 = vpop.f32.mrb[0].mxu0
    %402 = vmatprep.mubr.f32.mxu0 %v244
    %403 = vmatmul.mubr.f32.gmra.mrb[0].mxu0 %v243
    %v404 = vpop.f32.mrb[0].mxu0
    %v405 = vadd.f32 0.0, %v404
    %v406 = vpop.f32.mrb[0].mxu0
    %407 = vmatprep.mubr.f32.mxu0 %v248
    %408 = vmatmul.mubr.f32.gmra.mrb[0].mxu0 %v247
    %v409 = vpop.f32.mrb[0].mxu0
    %v410 = vadd.f32 0.0, %v409
    %v411 = vpop.f32.mrb[0].mxu0
    %412 = vmatprep.mubr.f32.mxu0 %v252
    %413 = vmatmul.mubr.f32.gmra.mrb[0].mxu0 %v251
    %v414 = vpop.f32.mrb[0].mxu0
    %v415 = vadd.f32 0.0, %v414
    %v416 = vpop.f32.mrb[0].mxu0
    %417 = vmatprep.mubr.f32.mxu0 %v256
    %418 = vmatmul.mubr.f32.gmra.mrb[0].mxu0 %v255
    %v419 = vpop.f32.mrb[0].mxu0
    %v420 = vadd.f32 0.0, %v419
    %v421 = vpop.f32.mrb[0].mxu0
    %422 = vdwg.mxu0
    %423 = vmatprep.subr.mxu0 0.0
    %424 = vmatpush1.msra.mxu0 %v291
    %425 = vmatprep.subr.mxu0 0.0
    %426 = vmatpush1.msra.mxu0 %v292
    %427 = vmatprep.subr.mxu0 0.0
    %428 = vmatpush1.msra.mxu0 %v293
    %429 = vmatprep.subr.mxu0 0.0
    %430 = vmatpush1.msra.mxu0 %v294
    %431 = vmatprep.subr.mxu0 0.0
    %432 = vmatpush1.msra.mxu0 %v295
    %433 = vmatprep.subr.mxu0 0.0
    %434 = vmatpush1.msra.mxu0 %v296
    %435 = vmatprep.subr.mxu0 0.0
    %436 = vmatpush1.msra.mxu0 %v297
    %437 = vmatprep.subr.mxu0 0.0
    %438 = vmatpush1.msra.mxu0 %v298
    %439 = vmatprep.subr.mxu0 0.0
    %440 = vmatpush1.msra.mxu0 %v299
    %441 = vmatprep.subr.mxu0 0.0
    %442 = vmatpush1.msra.mxu0 %v300
    %443 = vmatprep.subr.mxu0 0.0
    %444 = vmatpush1.msra.mxu0 %v301
    %445 = vmatprep.subr.mxu0 0.0
    %446 = vmatpush1.msra.mxu0 %v302
    %447 = vmatprep.subr.mxu0 0.0
    %448 = vmatpush1.msra.mxu0 %v303
    %449 = vmatprep.subr.mxu0 0.0
    %450 = vmatpush1.msra.mxu0 %v304
    %451 = vmatprep.subr.mxu0 0.0
    %452 = vmatpush1.msra.mxu0 %v305
    %453 = vmatprep.subr.mxu0 0.0
    %454 = vmatpush1.msra.mxu0 %v306
    %455 = vmatprep.subr.mxu0 0.0
    %456 = vmatpush1.msra.mxu0 %v307
    %457 = vmatprep.subr.mxu0 0.0
    %458 = vmatpush1.msra.mxu0 %v308
    %459 = vmatprep.subr.mxu0 0.0
    %460 = vmatpush1.msra.mxu0 %v309
    %461 = vmatprep.subr.mxu0 0.0
    %462 = vmatpush1.msra.mxu0 %v310
    %463 = vmatprep.subr.mxu0 0.0
    %464 = vmatpush1.msra.mxu0 %v311
    %465 = vmatprep.subr.mxu0 0.0
    %466 = vmatpush1.msra.mxu0 %v312
    %467 = vmatprep.subr.mxu0 0.0
    %468 = vmatpush1.msra.mxu0 %v313
    %469 = vmatprep.subr.mxu0 0.0
    %470 = vmatpush1.msra.mxu0 %v314
    %471 = vmatprep.subr.mxu0 0.0
    %472 = vmatpush1.msra.mxu0 %v315
    %473 = vmatprep.subr.mxu0 0.0
    %474 = vmatpush1.msra.mxu0 %v316
    %475 = vmatprep.subr.mxu0 0.0
    %476 = vmatpush1.msra.mxu0 %v317
    %477 = vmatprep.subr.mxu0 0.0
    %478 = vmatpush1.msra.mxu0 %v318
    %479 = vmatprep.subr.mxu0 0.0
    %480 = vmatpush1.msra.mxu0 %v319
    %481 = vmatprep.subr.mxu0 0.0
    %482 = vmatpush1.msra.mxu0 %v320
    %483 = vmatprep.subr.mxu0 0.0
    %484 = vmatpush1.msra.mxu0 %v321
    %485 = vmatprep.subr.mxu0 0.0
    %486 = vmatpush1.msra.mxu0 %v322
    %487 = vmatprep.mubr.f32.mxu0 %v234
    %488 = vmatmul.mubr.f32.gmra.mrb[0].mxu0 %v233
    %v489 = vpop.f32.mrb[0].mxu0
    %v490 = vadd.f32 %v390, %v489
    %v491 = vpop.f32.mrb[0].mxu0
    %492 = vmatprep.mubr.f32.mxu0 %v238
    %493 = vmatmul.mubr.f32.gmra.mrb[0].mxu0 %v237
    %v494 = vpop.f32.mrb[0].mxu0
    %v495 = vadd.f32 %v395, %v494
    %v496 = vpop.f32.mrb[0].mxu0
    %497 = vmatprep.mubr.f32.mxu0 %v242
    %498 = vmatmul.mubr.f32.gmra.mrb[0].mxu0 %v241
    %v499 = vpop.f32.mrb[0].mxu0
    %v500 = vadd.f32 %v400, %v499
    %v501 = vpop.f32.mrb[0].mxu0
    %502 = vmatprep.mubr.f32.mxu0 %v246
    %503 = vmatmul.mubr.f32.gmra.mrb[0].mxu0 %v245
    %v504 = vpop.f32.mrb[0].mxu0
    %v505 = vadd.f32 %v405, %v504
    %v506 = vpop.f32.mrb[0].mxu0
    %507 = vmatprep.mubr.f32.mxu0 %v250
    %508 = vmatmul.mubr.f32.gmra.mrb[0].mxu0 %v249
    %v509 = vpop.f32.mrb[0].mxu0
    %v510 = vadd.f32 %v410, %v509
    %v511 = vpop.f32.mrb[0].mxu0
    %512 = vmatprep.mubr.f32.mxu0 %v254
    %513 = vmatmul.mubr.f32.gmra.mrb[0].mxu0 %v253
    %v514 = vpop.f32.mrb[0].mxu0
    %v515 = vadd.f32 %v415, %v514
    %v516 = vpop.f32.mrb[0].mxu0
    %517 = vmatprep.mubr.f32.mxu0 %v258
    %518 = vmatmul.mubr.f32.gmra.mrb[0].mxu0 %v257
    %v519 = vpop.f32.mrb[0].mxu0
    %v520 = vadd.f32 %v420, %v519
    %v521 = vpop.f32.mrb[0].mxu0
    %522 = vdwg.mxu0
    %523 = vst [vmem:[#allocation6] sm:$0xff] %v490
    %524 = vst [vmem:[#allocation6 + $0x8] sm:$0xff] %v495
    %525 = vst [vmem:[#allocation6 + $0x10] sm:$0xff] %v500
    %526 = vst [vmem:[#allocation6 + $0x18] sm:$0xff] %v505
    %527 = vst [vmem:[#allocation6 + $0x20] sm:$0xff] %v510
    %528 = vst [vmem:[#allocation6 + $0x28] sm:$0xff] %v515
    %529 = vst [vmem:[#allocation6 + $0x30] sm:$0x7] %v520
    // Predicated region
    $region14: #{tpu_custom_call.1} parent=1 // pred_check
      _
    $region15: #{tpu_custom_call.1} parent=1 // pred_check_branch
      %531 = sbr.rel (0) target = $region17
    $region16: #{tpu_custom_call.1} parent=1 // pred_region
      %s533 = ssub.s32 896, 896
      %534 = vsyncadd [#allocation5], %s533
      %s535 = sshll.u32 [#allocation6], 4
      %s536 = int_to_ptr.vmem [resolvable:$true] %s535
      %541 = dma.vmem_to_hbm [thread:$0]  %s536, 896, %s2, [#allocation5], 128, 128, 8
    $region17: #{tpu_custom_call.1} parent=1 // pred_fallthru
      _
    // Predicated region
    $region18: #{tpu_custom_call.1} parent=1 // pred_check
      _
    $region19: #{tpu_custom_call.1} parent=1 // pred_check_branch
      %543 = sbr.rel (0) target = $region21
    $region20: #{tpu_custom_call.1} parent=1 // pred_region
      %544 = dma.done [#allocation5], 896
    $region21: #{tpu_custom_call.1} parent=1 // pred_fallthru
      _
    %545 = vsyncpa [#allocation4], 1
    %546 = vsyncpa [#allocation5], 1

</llo_original>
